<compile_context>
chip_gen: v7x
topology: tpu7x:2x2x1
jax: 0.10.0
libtpu: 0.0.40
codegen_flags: <defaults>
</compile_context>

<pallas_src>
import math

import numpy as np
import jax
import jax.numpy as jnp
from jax import lax
from jax.experimental import pallas as pl
from jax.experimental.pallas import tpu as pltpu

NUM_POS_FEATS = 32
TEMPERATURE = 2.0


def _round_up(x, m):
    return ((x + m - 1) // m) * m


def _pos_enc_kernel(bbox1_ref, w_ref, out_ref):
    # bbox1_ref: (TILE, 5)  f32 tile in VMEM, columns (x, y, h, w, 1)
    # w_ref    : (5, 8F)    f32 constant (column-select * 1/dim_t; row 4 = phase)
    # out_ref  : (TILE, 8F) output tile in VMEM
    angles = lax.dot_general(
        bbox1_ref[...], w_ref[...],
        dimension_numbers=(((1,), (0,)), ((), ())),
        preferred_element_type=jnp.float32,
        precision=lax.Precision.HIGHEST,   # keep full f32 fidelity (MXU is idle)
    )                                      # (TILE, 8F)
    out_ref[...] = jnp.sin(angles).astype(out_ref.dtype)


def _make_weight(num_pos_feats, temperature):
    out_dim = 8 * num_pos_feats
    dim_t = np.asarray(temperature, dtype=np.float64) ** np.arange(
        num_pos_feats, dtype=np.float64)
    inv_dim_t = (1.0 / dim_t).astype(np.float32)          # (F,)
    # Output block order: x-sin, x-cos, y-sin, y-cos, w-sin, w-cos, h-sin, h-cos
    # bbox columns are (x, y, h, w).
    col_per_block = (0, 0, 1, 1, 3, 3, 2, 2)
    phase_per_block = (0.0, math.pi / 2) * 4
    w = np.zeros((5, out_dim), dtype=np.float32)
    for blk, (c, ph) in enumerate(zip(col_per_block, phase_per_block)):
        sl = slice(blk * num_pos_feats, (blk + 1) * num_pos_feats)
        w[c, sl] = inv_dim_t
        w[4, sl] = ph                                      # folded phase row
    return w


def _choose_tile(n, tile_n, min_split_rows=1024):
    """Row-tile selection: big tiles, >=2 grid steps when worthwhile (v7x)."""
    tile_n = max(8, _round_up(int(tile_n), 8))
    if n > tile_n:
        return tile_n                       # grid already has >= 2 steps
    if n >= min_split_rows:
        half = _round_up(-(-n // 2), 8)
        if half < n:                        # split so both v7x TCs get work
            return half
    return n                                # single block == full array dims


def position_encoding_bbox_sine(bbox, *, num_pos_feats=NUM_POS_FEATS,
                                temperature=TEMPERATURE, tile_n=4096,
                                out_dtype=jnp.float32):
    """bbox: [N, 4] float32 -> [N, 8 * num_pos_feats]."""
    n = bbox.shape[0]
    assert n >= 1 and bbox.shape[1] == 4
    out_dim = 8 * num_pos_feats

    w5 = jnp.asarray(_make_weight(num_pos_feats, temperature))

    tile = _choose_tile(n, tile_n)
    steps = -(-n // tile)
    padded_rows = steps * tile

    # [bbox | 1]; pad only this tiny input (20 B/row) up to steps*tile rows.
    # The 1 KB/row output is emitted at its exact (N, 8F) shape -> no out[:n]
    # full-output copy after the kernel.
    bbox1 = jnp.concatenate(
        [bbox.astype(jnp.float32), jnp.ones((n, 1), jnp.float32)], axis=1)
    if padded_rows != n:
        bbox1 = jnp.pad(bbox1, ((0, padded_rows - n), (0, 0)))

    # VMEM budget per step: double-buffered output tile + f32 angles temp +
    # double-buffered (lane-padded to 128) bbox tile + resident W.
    vmem_est = (2 * tile * out_dim * 4 + tile * out_dim * 4
                + 2 * tile * 128 * 4 + 2 * 8 * out_dim * 4)
    vmem_limit = int(min(max(vmem_est * 13 // 10, 32 * 1024 * 1024),
                         64 * 1024 * 1024))

    out = pl.pallas_call(
        _pos_enc_kernel,
        out_shape=jax.ShapeDtypeStruct((n, out_dim), out_dtype),
        grid_spec=pltpu.PrefetchScalarGridSpec(
            num_scalar_prefetch=0,
            grid=(steps,),
            in_specs=[
                # (tile, 5) row block: contiguous HBM region per step.
                pl.BlockSpec((tile, 5), lambda i: (i, 0)),
                # Constant: same block every step -> stays resident in VMEM.
                pl.BlockSpec((5, out_dim), lambda i: (0, 0)),
            ],
            # Ragged last block (when tile does not divide N) is masked on
            # writeback by Pallas.
            out_specs=pl.BlockSpec((tile, out_dim), lambda i: (i, 0)),
        ),
        compiler_params=pltpu.CompilerParams(
            dimension_semantics=("parallel",),
            vmem_limit_bytes=vmem_limit,
        ),
    )(bbox1, w5)
    return out


def _reference(bbox, num_pos_feats=NUM_POS_FEATS, temperature=TEMPERATURE):
    dim_t = temperature ** jnp.arange(num_pos_feats, dtype=jnp.float32)
    x = bbox[:, 0, None] / dim_t
    y = bbox[:, 1, None] / dim_t
    h = bbox[:, 2, None] / dim_t
    w = bbox[:, 3, None] / dim_t
    cat = lambda e: jnp.concatenate((jnp.sin(e), jnp.cos(e)), axis=-1)
    return jnp.concatenate((cat(x), cat(y), cat(w), cat(h)), axis=-1)


if __name__ == "__main__":
    key = jax.random.PRNGKey(0)
    k1, k2 = jax.random.split(key)

    # Small, awkward N (not a multiple of 8): single full-array block path.
    bbox_small = jax.random.uniform(k1, (13, 4), dtype=jnp.float32)
    out_small = jax.block_until_ready(position_encoding_bbox_sine(bbox_small))
    assert out_small.shape == (13, 8 * NUM_POS_FEATS)
    assert jnp.allclose(out_small, _reference(bbox_small), atol=1e-5, rtol=1e-5)

    # Larger N: >=2 "parallel" grid steps (v7x split), padded input rows, and a
    # masked ragged last output block -- exercises the no-slice output path.
    bbox_big = jax.random.uniform(k2, (1500, 4), dtype=jnp.float32)
    out_big = jax.block_until_ready(position_encoding_bbox_sine(bbox_big))
    assert out_big.shape == (1500, 8 * NUM_POS_FEATS)
    assert jnp.allclose(out_big, _reference(bbox_big), atol=1e-5, rtol=1e-5)

    print("KERNEL_OK")
</pallas_src>

<mosaic_0001>
module attributes {stable_mosaic.version = 11 : i64} {
  func.func @_pos_enc_kernel(%arg0: i32, %arg1: memref<13x5xf32, #tpu.memory_space<vmem>>, %arg2: memref<5x256xf32, #tpu.memory_space<vmem>>, %arg3: memref<13x256xf32, #tpu.memory_space<vmem>>) attributes {dimension_semantics = [#tpu.dimension_semantics<parallel>], iteration_bounds = array<i64: 1>, scalar_prefetch = 0 : i64, scratch_operands = 0 : i64, tpu.core_type = #tpu.core_type<tc>, window_params = [{transform_indices = @transform_0, window_bounds = array<i64: 13, 5>}, {pipeline_mode = #tpu.pipeline_mode<synchronous>, transform_indices = @transform_1, window_bounds = array<i64: 5, 256>}, {transform_indices = @transform_2, window_bounds = array<i64: 13, 256>}]} {
    %c0 = arith.constant 0 : index
    %c0_0 = arith.constant 0 : index
    %0 = vector.load %arg1[%c0, %c0_0] : memref<13x5xf32, #tpu.memory_space<vmem>>, vector<13x5xf32>
    %c0_1 = arith.constant 0 : index
    %c0_2 = arith.constant 0 : index
    %1 = vector.load %arg2[%c0_1, %c0_2] : memref<5x256xf32, #tpu.memory_space<vmem>>, vector<5x256xf32>
    %cst = arith.constant dense<0.000000e+00> : vector<13x256xf32>
    %2 = tpu.matmul %0, %1, %cst {dimension_numbers = #tpu.dot_dimension_numbers<[1], [0], [0], [1], [0, 0, 1, 1], [], []>, precision = #tpu.contract_precision<fp32>} : vector<13x5xf32>, vector<5x256xf32>, vector<13x256xf32> -> vector<13x256xf32>
    %3 = math.sin %2 : vector<13x256xf32>
    %c0_3 = arith.constant 0 : index
    %c0_4 = arith.constant 0 : index
    %4 = vector.load %arg3[%c0_3, %c0_4] : memref<13x256xf32, #tpu.memory_space<vmem>>, vector<13x256xf32>
    tpu.vector_store %arg3[%c0_3, %c0_4], %3 {strides = array<i32>} : memref<13x256xf32, #tpu.memory_space<vmem>>, vector<13x256xf32>,
    return
  }
  func.func @transform_0(%arg0: i32) -> (i32, i32) {
    %c0_i32 = arith.constant 0 : i32
    %c0_i32_0 = arith.constant 0 : i32
    return %arg0, %c0_i32 : i32, i32
  }
  func.func @transform_1(%arg0: i32) -> (i32, i32) {
    %c0_i32 = arith.constant 0 : i32
    %c0_i32_0 = arith.constant 0 : i32
    %c0_i32_1 = arith.constant 0 : i32
    return %c0_i32, %c0_i32_0 : i32, i32
  }
  func.func @transform_2(%arg0: i32) -> (i32, i32) {
    %c0_i32 = arith.constant 0 : i32
    %c0_i32_0 = arith.constant 0 : i32
    return %arg0, %c0_i32 : i32, i32
  }
}

</mosaic_0001>

<llo_original>
// kernel: tpu_custom_call.1
$region0: #{tpu_custom_call.1}
  #allocation0 [shape = 'u32[]', space=smem, size = 0x4, offset = 0x4, fixed_abs, tag = 'smem constant byte address 0x4 - core index']
  #allocation1 [shape = 'u32[144,128]{1,0:T(1,128)}', space=vmem, size = 0x12000, scoped, tag = 'internal scratch']
  %s0 = inlined_call_operand.vmem [shape: f32[13,5], index: 0, kind: input, shape index: {}]
  %s1 = inlined_call_operand.vmem [shape: f32[5,256], index: 1, kind: input, shape index: {}]
  %s2 = inlined_call_operand.hbm [shape: f32[13,256], index: 2, kind: output, shape index: {}]
  %s3 = sld [smem:[#allocation0]]
  $region18: #{tpu_custom_call.1} parent=0
    _
  %s5 = ssub.s32 1, %s3
  %s6 = scalar_select 0, %s5, %s3
  $region1: #{tpu_custom_call.1} parent=0
    #allocation2 [shape = 'u8[16384]{0}', space=vmem, size = 0x4000, scoped, tag = 'output window, operand 0, single buffered']
    #allocation3 [shape = 's32[1]{0}', space=sflag, size = 0x4, scoped, tag = 'scoped memory for tpu_custom_call.1']
    %7 = vsyncpa [#allocation3], 0
    // Predicated region
    $region2: #{tpu_custom_call.1} parent=1 // pred_check
      _
    $region3: #{tpu_custom_call.1} parent=1 // pred_check_branch
      %9 = sbr.rel (0) target = $region5
    $region4: #{tpu_custom_call.1} parent=1 // pred_region
      _
    $region5: #{tpu_custom_call.1} parent=1 // pred_fallthru
      _
    // Predicated region
    $region6: #{tpu_custom_call.1} parent=1 // pred_check
      _
    $region7: #{tpu_custom_call.1} parent=1 // pred_check_branch
      %11 = sbr.rel (0) target = $region9
    $region8: #{tpu_custom_call.1} parent=1 // pred_region
      _
    $region9: #{tpu_custom_call.1} parent=1 // pred_fallthru
      _
    %v12 = vld [vmem:[%s0] sm:$0xff]
    %v13 = vld [vmem:[%s0 + $0x8] sm:$0x1f]
    %v14 = vld [vmem:[%s1] sm:$0x1f]
    %v15 = vld [vmem:[%s1 + $0x8] sm:$0x1f]
    %vm16 = vcmask 39936
    %v18 = vsel %vm16, %v12, 0
    %v21 = vsel %vm16, %v13, 0
    %vm23 = vcmask 1044480
    %v25 = vsel %vm23, %v14, 0
    %v28 = vsel %vm23, %v15, 0
    %v30 = vand.u32 %v28, 4294901760
    %31 = vmatprep.subr.mxu0 %v30
    %v32 = vand.u32 %v25, 4294901760
    %33 = vmatpush1.msra.mxu0 %v32
    %34 = vmatprep.subr.mxu0 0.0
    %35 = vmatpush1.msra.mxu0 0.0
    %36 = vmatprep.subr.mxu0 0.0
    %37 = vmatpush1.msra.mxu0 0.0
    %38 = vmatprep.subr.mxu0 0.0
    %39 = vmatpush1.msra.mxu0 0.0
    %40 = vmatprep.subr.mxu0 0.0
    %41 = vmatpush1.msra.mxu0 0.0
    %42 = vmatprep.subr.mxu0 0.0
    %43 = vmatpush1.msra.mxu0 0.0
    %44 = vmatprep.subr.mxu0 0.0
    %45 = vmatpush1.msra.mxu0 0.0
    %46 = vmatprep.subr.mxu0 0.0
    %47 = vmatpush1.msra.mxu0 0.0
    %48 = vmatprep.subr.mxu0 0.0
    %49 = vmatpush1.msra.mxu0 0.0
    %50 = vmatprep.subr.mxu0 0.0
    %51 = vmatpush1.msra.mxu0 0.0
    %52 = vmatprep.subr.mxu0 0.0
    %53 = vmatpush1.msra.mxu0 0.0
    %54 = vmatprep.subr.mxu0 0.0
    %55 = vmatpush1.msra.mxu0 0.0
    %56 = vmatprep.subr.mxu0 0.0
    %57 = vmatpush1.msra.mxu0 0.0
    %58 = vmatprep.subr.mxu0 0.0
    %59 = vmatpush1.msra.mxu0 0.0
    %60 = vmatprep.subr.mxu0 0.0
    %61 = vmatpush1.msra.mxu0 0.0
    %62 = vmatprep.subr.mxu0 0.0
    %63 = vmatpush1.msra.mxu0 0.0
    %64 = vmatprep.subr.mxu0 0.0
    %65 = vmatpush1.msra.mxu0 0.0
    %66 = vmatprep.subr.mxu0 0.0
    %67 = vmatpush1.msra.mxu0 0.0
    %68 = vmatprep.subr.mxu0 0.0
    %69 = vmatpush1.msra.mxu0 0.0
    %70 = vmatprep.subr.mxu0 0.0
    %71 = vmatpush1.msra.mxu0 0.0
    %72 = vmatprep.subr.mxu0 0.0
    %73 = vmatpush1.msra.mxu0 0.0
    %74 = vmatprep.subr.mxu0 0.0
    %75 = vmatpush1.msra.mxu0 0.0
    %76 = vmatprep.subr.mxu0 0.0
    %77 = vmatpush1.msra.mxu0 0.0
    %78 = vmatprep.subr.mxu0 0.0
    %79 = vmatpush1.msra.mxu0 0.0
    %80 = vmatprep.subr.mxu0 0.0
    %81 = vmatpush1.msra.mxu0 0.0
    %82 = vmatprep.subr.mxu0 0.0
    %83 = vmatpush1.msra.mxu0 0.0
    %84 = vmatprep.subr.mxu0 0.0
    %85 = vmatpush1.msra.mxu0 0.0
    %86 = vmatprep.subr.mxu0 0.0
    %87 = vmatpush1.msra.mxu0 0.0
    %88 = vmatprep.subr.mxu0 0.0
    %89 = vmatpush1.msra.mxu0 0.0
    %90 = vmatprep.subr.mxu0 0.0
    %91 = vmatpush1.msra.mxu0 0.0
    %92 = vmatprep.subr.mxu0 0.0
    %93 = vmatpush1.msra.mxu0 0.0
    %94 = vmatprep.subr.mxu0 0.0
    %95 = vmatpush1.msra.mxu0 0.0
    %96 = vmatprep.mubr.f32.mxu0 0.0
    %v97 = vand.u32 %v18, 4294901760
    %v98 = vsub.f32 %v18, %v97
    %v99 = vand.u32 %v98, 4294901760
    %v100 = vsub.f32 %v98, %v99
    %v101 = vand.u32 %v100, 4294901760
    %102 = vmatmul.mubr.f32.gmra.mrb[0].mxu0 %v101
    %v103 = vpop.f32.mrb[0].mxu0
    %v104 = vadd.f32 0.0, %v103
    %v105 = vpop.f32.mrb[0].mxu0
    %v106 = vadd.f32 0.0, %v105
    %107 = vmatprep.mubr.f32.mxu0 0.0
    %v108 = vand.u32 %v21, 4294901760
    %v109 = vsub.f32 %v21, %v108
    %v110 = vand.u32 %v109, 4294901760
    %v111 = vsub.f32 %v109, %v110
    %v112 = vand.u32 %v111, 4294901760
    %113 = vmatmul.mubr.f32.gmra.mrb[0].mxu0 %v112
    %v114 = vpop.f32.mrb[0].mxu0
    %v115 = vadd.f32 0.0, %v114
    %v116 = vpop.f32.mrb[0].mxu0
    %v117 = vadd.f32 0.0, %v116
    %118 = vdwg.mxu0
    %v119 = vand.u32 %v28, 4294901760
    %v120 = vsub.f32 %v28, %v119
    %v121 = vand.u32 %v120, 4294901760
    %v122 = vsub.f32 %v120, %v121
    %v123 = vand.u32 %v122, 4294901760
    %124 = vmatprep.subr.mxu0 %v123
    %v125 = vand.u32 %v25, 4294901760
    %v126 = vsub.f32 %v25, %v125
    %v127 = vand.u32 %v126, 4294901760
    %v128 = vsub.f32 %v126, %v127
    %v129 = vand.u32 %v128, 4294901760
    %130 = vmatpush1.msra.mxu0 %v129
    %131 = vmatprep.subr.mxu0 0.0
    %132 = vmatpush1.msra.mxu0 0.0
    %133 = vmatprep.subr.mxu0 0.0
    %134 = vmatpush1.msra.mxu0 0.0
    %135 = vmatprep.subr.mxu0 0.0
    %136 = vmatpush1.msra.mxu0 0.0
    %137 = vmatprep.subr.mxu0 0.0
    %138 = vmatpush1.msra.mxu0 0.0
    %139 = vmatprep.subr.mxu0 0.0
    %140 = vmatpush1.msra.mxu0 0.0
    %141 = vmatprep.subr.mxu0 0.0
    %142 = vmatpush1.msra.mxu0 0.0
    %143 = vmatprep.subr.mxu0 0.0
    %144 = vmatpush1.msra.mxu0 0.0
    %145 = vmatprep.subr.mxu0 0.0
    %146 = vmatpush1.msra.mxu0 0.0
    %147 = vmatprep.subr.mxu0 0.0
    %148 = vmatpush1.msra.mxu0 0.0
    %149 = vmatprep.subr.mxu0 0.0
    %150 = vmatpush1.msra.mxu0 0.0
    %151 = vmatprep.subr.mxu0 0.0
    %152 = vmatpush1.msra.mxu0 0.0
    %153 = vmatprep.subr.mxu0 0.0
    %154 = vmatpush1.msra.mxu0 0.0
    %155 = vmatprep.subr.mxu0 0.0
    %156 = vmatpush1.msra.mxu0 0.0
    %157 = vmatprep.subr.mxu0 0.0
    %158 = vmatpush1.msra.mxu0 0.0
    %159 = vmatprep.subr.mxu0 0.0
    %160 = vmatpush1.msra.mxu0 0.0
    %161 = vmatprep.subr.mxu0 0.0
    %162 = vmatpush1.msra.mxu0 0.0
    %163 = vmatprep.subr.mxu0 0.0
    %164 = vmatpush1.msra.mxu0 0.0
    %165 = vmatprep.subr.mxu0 0.0
    %166 = vmatpush1.msra.mxu0 0.0
    %167 = vmatprep.subr.mxu0 0.0
    %168 = vmatpush1.msra.mxu0 0.0
    %169 = vmatprep.subr.mxu0 0.0
    %170 = vmatpush1.msra.mxu0 0.0
    %171 = vmatprep.subr.mxu0 0.0
    %172 = vmatpush1.msra.mxu0 0.0
    %173 = vmatprep.subr.mxu0 0.0
    %174 = vmatpush1.msra.mxu0 0.0
    %175 = vmatprep.subr.mxu0 0.0
    %176 = vmatpush1.msra.mxu0 0.0
    %177 = vmatprep.subr.mxu0 0.0
    %178 = vmatpush1.msra.mxu0 0.0
    %179 = vmatprep.subr.mxu0 0.0
    %180 = vmatpush1.msra.mxu0 0.0
    %181 = vmatprep.subr.mxu0 0.0
    %182 = vmatpush1.msra.mxu0 0.0
    %183 = vmatprep.subr.mxu0 0.0
    %184 = vmatpush1.msra.mxu0 0.0
    %185 = vmatprep.subr.mxu0 0.0
    %186 = vmatpush1.msra.mxu0 0.0
    %187 = vmatprep.subr.mxu0 0.0
    %188 = vmatpush1.msra.mxu0 0.0
    %189 = vmatprep.subr.mxu0 0.0
    %190 = vmatpush1.msra.mxu0 0.0
    %191 = vmatprep.subr.mxu0 0.0
    %192 = vmatpush1.msra.mxu0 0.0
    %193 = vmatprep.mubr.f32.mxu0 0.0
    %v194 = vand.u32 %v18, 4294901760
    %195 = vmatmul.mubr.f32.gmra.mrb[0].mxu0 %v194
    %v196 = vpop.f32.mrb[0].mxu0
    %v197 = vadd.f32 %v104, %v196
    %v198 = vpop.f32.mrb[0].mxu0
    %v199 = vadd.f32 %v106, %v198
    %200 = vmatprep.mubr.f32.mxu0 0.0
    %v201 = vand.u32 %v21, 4294901760
    %202 = vmatmul.mubr.f32.gmra.mrb[0].mxu0 %v201
    %v203 = vpop.f32.mrb[0].mxu0
    %v204 = vadd.f32 %v115, %v203
    %v205 = vpop.f32.mrb[0].mxu0
    %v206 = vadd.f32 %v117, %v205
    %207 = vdwg.mxu0
    %v208 = vand.u32 %v28, 4294901760
    %v209 = vsub.f32 %v28, %v208
    %210 = vmatprep.subr.mxu0 %v209
    %v211 = vand.u32 %v25, 4294901760
    %v212 = vsub.f32 %v25, %v211
    %213 = vmatpush1.msra.mxu0 %v212
    %214 = vmatprep.subr.mxu0 0.0
    %215 = vmatpush1.msra.mxu0 0.0
    %216 = vmatprep.subr.mxu0 0.0
    %217 = vmatpush1.msra.mxu0 0.0
    %218 = vmatprep.subr.mxu0 0.0
    %219 = vmatpush1.msra.mxu0 0.0
    %220 = vmatprep.subr.mxu0 0.0
    %221 = vmatpush1.msra.mxu0 0.0
    %222 = vmatprep.subr.mxu0 0.0
    %223 = vmatpush1.msra.mxu0 0.0
    %224 = vmatprep.subr.mxu0 0.0
    %225 = vmatpush1.msra.mxu0 0.0
    %226 = vmatprep.subr.mxu0 0.0
    %227 = vmatpush1.msra.mxu0 0.0
    %228 = vmatprep.subr.mxu0 0.0
    %229 = vmatpush1.msra.mxu0 0.0
    %230 = vmatprep.subr.mxu0 0.0
    %231 = vmatpush1.msra.mxu0 0.0
    %232 = vmatprep.subr.mxu0 0.0
    %233 = vmatpush1.msra.mxu0 0.0
    %234 = vmatprep.subr.mxu0 0.0
    %235 = vmatpush1.msra.mxu0 0.0
    %236 = vmatprep.subr.mxu0 0.0
    %237 = vmatpush1.msra.mxu0 0.0
    %238 = vmatprep.subr.mxu0 0.0
    %239 = vmatpush1.msra.mxu0 0.0
    %240 = vmatprep.subr.mxu0 0.0
    %241 = vmatpush1.msra.mxu0 0.0
    %242 = vmatprep.subr.mxu0 0.0
    %243 = vmatpush1.msra.mxu0 0.0
    %244 = vmatprep.subr.mxu0 0.0
    %245 = vmatpush1.msra.mxu0 0.0
    %246 = vmatprep.subr.mxu0 0.0
    %247 = vmatpush1.msra.mxu0 0.0
    %248 = vmatprep.subr.mxu0 0.0
    %249 = vmatpush1.msra.mxu0 0.0
    %250 = vmatprep.subr.mxu0 0.0
    %251 = vmatpush1.msra.mxu0 0.0
    %252 = vmatprep.subr.mxu0 0.0
    %253 = vmatpush1.msra.mxu0 0.0
    %254 = vmatprep.subr.mxu0 0.0
    %255 = vmatpush1.msra.mxu0 0.0
    %256 = vmatprep.subr.mxu0 0.0
    %257 = vmatpush1.msra.mxu0 0.0
    %258 = vmatprep.subr.mxu0 0.0
    %259 = vmatpush1.msra.mxu0 0.0
    %260 = vmatprep.subr.mxu0 0.0
    %261 = vmatpush1.msra.mxu0 0.0
    %262 = vmatprep.subr.mxu0 0.0
    %263 = vmatpush1.msra.mxu0 0.0
    %264 = vmatprep.subr.mxu0 0.0
    %265 = vmatpush1.msra.mxu0 0.0
    %266 = vmatprep.subr.mxu0 0.0
    %267 = vmatpush1.msra.mxu0 0.0
    %268 = vmatprep.subr.mxu0 0.0
    %269 = vmatpush1.msra.mxu0 0.0
    %270 = vmatprep.subr.mxu0 0.0
    %271 = vmatpush1.msra.mxu0 0.0
    %272 = vmatprep.subr.mxu0 0.0
    %273 = vmatpush1.msra.mxu0 0.0
    %274 = vmatprep.subr.mxu0 0.0
    %275 = vmatpush1.msra.mxu0 0.0
    %276 = vmatprep.mubr.f32.mxu0 0.0
    %v277 = vand.u32 %v18, 4294901760
    %v278 = vsub.f32 %v18, %v277
    %279 = vmatmul.mubr.f32.gmra.mrb[0].mxu0 %v278
    %v280 = vpop.f32.mrb[0].mxu0
    %v281 = vadd.f32 %v197, %v280
    %v282 = vpop.f32.mrb[0].mxu0
    %v283 = vadd.f32 %v199, %v282
    %284 = vmatprep.mubr.f32.mxu0 0.0
    %v285 = vand.u32 %v21, 4294901760
    %v286 = vsub.f32 %v21, %v285
    %287 = vmatmul.mubr.f32.gmra.mrb[0].mxu0 %v286
    %v288 = vpop.f32.mrb[0].mxu0
    %v289 = vadd.f32 %v204, %v288
    %v290 = vpop.f32.mrb[0].mxu0
    %v291 = vadd.f32 %v206, %v290
    %292 = vdwg.mxu0
    %v293 = vand.u32 %v28, 4294901760
    %294 = vmatprep.subr.mxu0 %v293
    %v295 = vand.u32 %v25, 4294901760
    %296 = vmatpush1.msra.mxu0 %v295
    %297 = vmatprep.subr.mxu0 0.0
    %298 = vmatpush1.msra.mxu0 0.0
    %299 = vmatprep.subr.mxu0 0.0
    %300 = vmatpush1.msra.mxu0 0.0
    %301 = vmatprep.subr.mxu0 0.0
    %302 = vmatpush1.msra.mxu0 0.0
    %303 = vmatprep.subr.mxu0 0.0
    %304 = vmatpush1.msra.mxu0 0.0
    %305 = vmatprep.subr.mxu0 0.0
    %306 = vmatpush1.msra.mxu0 0.0
    %307 = vmatprep.subr.mxu0 0.0
    %308 = vmatpush1.msra.mxu0 0.0
    %309 = vmatprep.subr.mxu0 0.0
    %310 = vmatpush1.msra.mxu0 0.0
    %311 = vmatprep.subr.mxu0 0.0
    %312 = vmatpush1.msra.mxu0 0.0
    %313 = vmatprep.subr.mxu0 0.0
    %314 = vmatpush1.msra.mxu0 0.0
    %315 = vmatprep.subr.mxu0 0.0
    %316 = vmatpush1.msra.mxu0 0.0
    %317 = vmatprep.subr.mxu0 0.0
    %318 = vmatpush1.msra.mxu0 0.0
    %319 = vmatprep.subr.mxu0 0.0
    %320 = vmatpush1.msra.mxu0 0.0
    %321 = vmatprep.subr.mxu0 0.0
    %322 = vmatpush1.msra.mxu0 0.0
    %323 = vmatprep.subr.mxu0 0.0
    %324 = vmatpush1.msra.mxu0 0.0
    %325 = vmatprep.subr.mxu0 0.0
    %326 = vmatpush1.msra.mxu0 0.0
    %327 = vmatprep.subr.mxu0 0.0
    %328 = vmatpush1.msra.mxu0 0.0
    %329 = vmatprep.subr.mxu0 0.0
    %330 = vmatpush1.msra.mxu0 0.0
    %331 = vmatprep.subr.mxu0 0.0
    %332 = vmatpush1.msra.mxu0 0.0
    %333 = vmatprep.subr.mxu0 0.0
    %334 = vmatpush1.msra.mxu0 0.0
    %335 = vmatprep.subr.mxu0 0.0
    %336 = vmatpush1.msra.mxu0 0.0
    %337 = vmatprep.subr.mxu0 0.0
    %338 = vmatpush1.msra.mxu0 0.0
    %339 = vmatprep.subr.mxu0 0.0
    %340 = vmatpush1.msra.mxu0 0.0
    %341 = vmatprep.subr.mxu0 0.0
    %342 = vmatpush1.msra.mxu0 0.0
    %343 = vmatprep.subr.mxu0 0.0
    %344 = vmatpush1.msra.mxu0 0.0
    %345 = vmatprep.subr.mxu0 0.0
    %346 = vmatpush1.msra.mxu0 0.0
    %347 = vmatprep.subr.mxu0 0.0
    %348 = vmatpush1.msra.mxu0 0.0
    %349 = vmatprep.subr.mxu0 0.0
    %350 = vmatpush1.msra.mxu0 0.0
    %351 = vmatprep.subr.mxu0 0.0
    %352 = vmatpush1.msra.mxu0 0.0
    %353 = vmatprep.subr.mxu0 0.0
    %354 = vmatpush1.msra.mxu0 0.0
    %355 = vmatprep.subr.mxu0 0.0
    %356 = vmatpush1.msra.mxu0 0.0
    %357 = vmatprep.subr.mxu0 0.0
    %358 = vmatpush1.msra.mxu0 0.0
    %359 = vmatprep.mubr.f32.mxu0 0.0
    %v360 = vand.u32 %v18, 4294901760
    %v361 = vsub.f32 %v18, %v360
    %v362 = vand.u32 %v361, 4294901760
    %363 = vmatmul.mubr.f32.gmra.mrb[0].mxu0 %v362
    %v364 = vpop.f32.mrb[0].mxu0
    %v365 = vadd.f32 %v281, %v364
    %v366 = vpop.f32.mrb[0].mxu0
    %v367 = vadd.f32 %v283, %v366
    %368 = vmatprep.mubr.f32.mxu0 0.0
    %v369 = vand.u32 %v21, 4294901760
    %v370 = vsub.f32 %v21, %v369
    %v371 = vand.u32 %v370, 4294901760
    %372 = vmatmul.mubr.f32.gmra.mrb[0].mxu0 %v371
    %v373 = vpop.f32.mrb[0].mxu0
    %v374 = vadd.f32 %v289, %v373
    %v375 = vpop.f32.mrb[0].mxu0
    %v376 = vadd.f32 %v291, %v375
    %377 = vdwg.mxu0
    %v378 = vand.u32 %v28, 4294901760
    %v379 = vsub.f32 %v28, %v378
    %v380 = vand.u32 %v379, 4294901760
    %381 = vmatprep.subr.mxu0 %v380
    %v382 = vand.u32 %v25, 4294901760
    %v383 = vsub.f32 %v25, %v382
    %v384 = vand.u32 %v383, 4294901760
    %385 = vmatpush1.msra.mxu0 %v384
    %386 = vmatprep.subr.mxu0 0.0
    %387 = vmatpush1.msra.mxu0 0.0
    %388 = vmatprep.subr.mxu0 0.0
    %389 = vmatpush1.msra.mxu0 0.0
    %390 = vmatprep.subr.mxu0 0.0
    %391 = vmatpush1.msra.mxu0 0.0
    %392 = vmatprep.subr.mxu0 0.0
    %393 = vmatpush1.msra.mxu0 0.0
    %394 = vmatprep.subr.mxu0 0.0
    %395 = vmatpush1.msra.mxu0 0.0
    %396 = vmatprep.subr.mxu0 0.0
    %397 = vmatpush1.msra.mxu0 0.0
    %398 = vmatprep.subr.mxu0 0.0
    %399 = vmatpush1.msra.mxu0 0.0
    %400 = vmatprep.subr.mxu0 0.0
    %401 = vmatpush1.msra.mxu0 0.0
    %402 = vmatprep.subr.mxu0 0.0
    %403 = vmatpush1.msra.mxu0 0.0
    %404 = vmatprep.subr.mxu0 0.0
    %405 = vmatpush1.msra.mxu0 0.0
    %406 = vmatprep.subr.mxu0 0.0
    %407 = vmatpush1.msra.mxu0 0.0
    %408 = vmatprep.subr.mxu0 0.0
    %409 = vmatpush1.msra.mxu0 0.0
    %410 = vmatprep.subr.mxu0 0.0
    %411 = vmatpush1.msra.mxu0 0.0
    %412 = vmatprep.subr.mxu0 0.0
    %413 = vmatpush1.msra.mxu0 0.0
    %414 = vmatprep.subr.mxu0 0.0
    %415 = vmatpush1.msra.mxu0 0.0
    %416 = vmatprep.subr.mxu0 0.0
    %417 = vmatpush1.msra.mxu0 0.0
    %418 = vmatprep.subr.mxu0 0.0
    %419 = vmatpush1.msra.mxu0 0.0
    %420 = vmatprep.subr.mxu0 0.0
    %421 = vmatpush1.msra.mxu0 0.0
    %422 = vmatprep.subr.mxu0 0.0
    %423 = vmatpush1.msra.mxu0 0.0
    %424 = vmatprep.subr.mxu0 0.0
    %425 = vmatpush1.msra.mxu0 0.0
    %426 = vmatprep.subr.mxu0 0.0
    %427 = vmatpush1.msra.mxu0 0.0
    %428 = vmatprep.subr.mxu0 0.0
    %429 = vmatpush1.msra.mxu0 0.0
    %430 = vmatprep.subr.mxu0 0.0
    %431 = vmatpush1.msra.mxu0 0.0
    %432 = vmatprep.subr.mxu0 0.0
    %433 = vmatpush1.msra.mxu0 0.0
    %434 = vmatprep.subr.mxu0 0.0
    %435 = vmatpush1.msra.mxu0 0.0
    %436 = vmatprep.subr.mxu0 0.0
    %437 = vmatpush1.msra.mxu0 0.0
    %438 = vmatprep.subr.mxu0 0.0
    %439 = vmatpush1.msra.mxu0 0.0
    %440 = vmatprep.subr.mxu0 0.0
    %441 = vmatpush1.msra.mxu0 0.0
    %442 = vmatprep.subr.mxu0 0.0
    %443 = vmatpush1.msra.mxu0 0.0
    %444 = vmatprep.subr.mxu0 0.0
    %445 = vmatpush1.msra.mxu0 0.0
    %446 = vmatprep.subr.mxu0 0.0
    %447 = vmatpush1.msra.mxu0 0.0
    %448 = vmatprep.mubr.f32.mxu0 0.0
    %v449 = vand.u32 %v18, 4294901760
    %450 = vmatmul.mubr.f32.gmra.mrb[0].mxu0 %v449
    %v451 = vpop.f32.mrb[0].mxu0
    %v452 = vadd.f32 %v365, %v451
    %v453 = vpop.f32.mrb[0].mxu0
    %v454 = vadd.f32 %v367, %v453
    %455 = vmatprep.mubr.f32.mxu0 0.0
    %v456 = vand.u32 %v21, 4294901760
    %457 = vmatmul.mubr.f32.gmra.mrb[0].mxu0 %v456
    %v458 = vpop.f32.mrb[0].mxu0
    %v459 = vadd.f32 %v374, %v458
    %v460 = vpop.f32.mrb[0].mxu0
    %v461 = vadd.f32 %v376, %v460
    %462 = vdwg.mxu0
    %v463 = vand.u32 %v28, 4294901760
    %464 = vmatprep.subr.mxu0 %v463
    %v465 = vand.u32 %v25, 4294901760
    %466 = vmatpush1.msra.mxu0 %v465
    %467 = vmatprep.subr.mxu0 0.0
    %468 = vmatpush1.msra.mxu0 0.0
    %469 = vmatprep.subr.mxu0 0.0
    %470 = vmatpush1.msra.mxu0 0.0
    %471 = vmatprep.subr.mxu0 0.0
    %472 = vmatpush1.msra.mxu0 0.0
    %473 = vmatprep.subr.mxu0 0.0
    %474 = vmatpush1.msra.mxu0 0.0
    %475 = vmatprep.subr.mxu0 0.0
    %476 = vmatpush1.msra.mxu0 0.0
    %477 = vmatprep.subr.mxu0 0.0
    %478 = vmatpush1.msra.mxu0 0.0
    %479 = vmatprep.subr.mxu0 0.0
    %480 = vmatpush1.msra.mxu0 0.0
    %481 = vmatprep.subr.mxu0 0.0
    %482 = vmatpush1.msra.mxu0 0.0
    %483 = vmatprep.subr.mxu0 0.0
    %484 = vmatpush1.msra.mxu0 0.0
    %485 = vmatprep.subr.mxu0 0.0
    %486 = vmatpush1.msra.mxu0 0.0
    %487 = vmatprep.subr.mxu0 0.0
    %488 = vmatpush1.msra.mxu0 0.0
    %489 = vmatprep.subr.mxu0 0.0
    %490 = vmatpush1.msra.mxu0 0.0
    %491 = vmatprep.subr.mxu0 0.0
    %492 = vmatpush1.msra.mxu0 0.0
    %493 = vmatprep.subr.mxu0 0.0
    %494 = vmatpush1.msra.mxu0 0.0
    %495 = vmatprep.subr.mxu0 0.0
    %496 = vmatpush1.msra.mxu0 0.0
    %497 = vmatprep.subr.mxu0 0.0
    %498 = vmatpush1.msra.mxu0 0.0
    %499 = vmatprep.subr.mxu0 0.0
    %500 = vmatpush1.msra.mxu0 0.0
    %501 = vmatprep.subr.mxu0 0.0
    %502 = vmatpush1.msra.mxu0 0.0
    %503 = vmatprep.subr.mxu0 0.0
    %504 = vmatpush1.msra.mxu0 0.0
    %505 = vmatprep.subr.mxu0 0.0
    %506 = vmatpush1.msra.mxu0 0.0
    %507 = vmatprep.subr.mxu0 0.0
    %508 = vmatpush1.msra.mxu0 0.0
    %509 = vmatprep.subr.mxu0 0.0
    %510 = vmatpush1.msra.mxu0 0.0
    %511 = vmatprep.subr.mxu0 0.0
    %512 = vmatpush1.msra.mxu0 0.0
    %513 = vmatprep.subr.mxu0 0.0
    %514 = vmatpush1.msra.mxu0 0.0
    %515 = vmatprep.subr.mxu0 0.0
    %516 = vmatpush1.msra.mxu0 0.0
    %517 = vmatprep.subr.mxu0 0.0
    %518 = vmatpush1.msra.mxu0 0.0
    %519 = vmatprep.subr.mxu0 0.0
    %520 = vmatpush1.msra.mxu0 0.0
    %521 = vmatprep.subr.mxu0 0.0
    %522 = vmatpush1.msra.mxu0 0.0
    %523 = vmatprep.subr.mxu0 0.0
    %524 = vmatpush1.msra.mxu0 0.0
    %525 = vmatprep.subr.mxu0 0.0
    %526 = vmatpush1.msra.mxu0 0.0
    %527 = vmatprep.subr.mxu0 0.0
    %528 = vmatpush1.msra.mxu0 0.0
    %529 = vmatprep.mubr.f32.mxu0 0.0
    %v530 = vand.u32 %v18, 4294901760
    %531 = vmatmul.mubr.f32.gmra.mrb[0].mxu0 %v530
    %v532 = vpop.f32.mrb[0].mxu0
    %v533 = vadd.f32 %v452, %v532
    %v534 = vpop.f32.mrb[0].mxu0
    %v535 = vadd.f32 %v454, %v534
    %536 = vmatprep.mubr.f32.mxu0 0.0
    %v537 = vand.u32 %v21, 4294901760
    %538 = vmatmul.mubr.f32.gmra.mrb[0].mxu0 %v537
    %v539 = vpop.f32.mrb[0].mxu0
    %v540 = vadd.f32 %v459, %v539
    %v541 = vpop.f32.mrb[0].mxu0
    %v542 = vadd.f32 %v461, %v541
    %543 = vdwg.mxu0
    %v544 = vand.u32 2147483647, %v533
    %vm545 = vcmp.le.f32.partialorder %v544, 0.7853982
    %vm546 = vcmp.lt.s32.totalorder %v533, 0
    %v547 = vand.u32 %v533, 2139095040
    %v548 = vshrl.u32 %v547, 23
    %v549 = vsub.s32 %v548, 127
    %v550 = vand.u32 2147483647, %v533
    %v551 = vand.u32 %v550, 8388607
    %v552 = vor.u32 %v551, 8388608
    %v553 = vsub.s32 0, %v552
    %v554 = vadd.s32 %v549, 1
    %vm555 = vcmp.gt.s32.totalorder %v554, 0
    %v556 = vsel %vm555, %v554, 0
    %v557 = vshrl.u32 %v556, 5
    %v558 = vand.u32 %v556, 31
    %v559 = vsub.s32 32, %v558
    %v560 = vshrl.u32 683565275, %v559
    %v561 = vshll.u32 683565275, %v558
    %v562 = vshrl.u32 2475754826, %v559
    %v563 = vor.u32 %v561, %v562
    %v564 = vshll.u32 2475754826, %v558
    %v565 = vshrl.u32 2131351028, %v559
    %v566 = vor.u32 %v564, %v565
    %v567 = vshll.u32 2131351028, %v558
    %v568 = vshrl.u32 2102212464, %v559
    %v569 = vor.u32 %v567, %v568
    %v570 = vshll.u32 2102212464, %v558
    %v571 = vshrl.u32 920167782, %v559
    %v572 = vor.u32 %v570, %v571
    %v573 = vshll.u32 920167782, %v558
    %v574 = vshrl.u32 1326507024, %v559
    %v575 = vor.u32 %v573, %v574
    %vm576 = vcmp.lt.s32.totalorder %v557, 1
    %vm577 = vcmp.lt.s32.totalorder %v557, 2
    %vm578 = vcmp.lt.s32.totalorder %v557, 3
    %vm579 = vcmp.lt.s32.totalorder %v557, 4
    %v580 = vsel %vm576, %v560, %v563
    %v581 = vsel %vm579, %v569, 2102212464
    %v582 = vsel %vm578, %v566, %v581
    %v583 = vsel %vm577, %v580, %v582
    %v584 = vsel %vm576, %v563, %v566
    %v585 = vsel %vm579, %v572, 920167782
    %v586 = vsel %vm578, %v569, %v585
    %v587 = vsel %vm577, %v584, %v586
    %v588 = vsel %vm576, %v566, %v569
    %v589 = vsel %vm579, %v575, 1326507024
    %v590 = vsel %vm578, %v572, %v589
    %v591 = vsel %vm577, %v588, %v590
    %v592 = vshll.u32 %v552, 8
    %v593 = vmul.u32.u64.compose %v592, %v591
    %v594 = vextract.low.u32 %v593
    %v595 = vextract.high.u32 %v593
    %v596 = vmul.u32.u64.compose %v592, %v587
    %v597 = vextract.low.u32 %v596
    %v598 = vextract.high.u32 %v596
    %v599 = vmul.u32 %v592, %v583
    %v600 = vadd.s32 %v595, %v597
    %vm601 = vc.u32 %v595, %v597
    %v602 = vadd.s32 %v598, 1
    %v603 = vsel %vm601, %v602, %v598
    %v604 = vadd.s32 %v599, %v603
    %v605 = vadd.s32 %v604, 536870912
    %v606 = vshrl.u32 %v605, 30
    %v607 = vshll.u32 %v606, 30
    %v608 = vsub.s32 %v604, %v607
    %vm609 = vcmp.lt.s32.totalorder %v608, 0
    %v610 = vsub.s32 0, %v608
    %v611 = vsel %vm609, %v610, %v608
    %v612 = vclz %v611
    %v613 = vsub.s32 %v612, 2
    %vm614 = vcmp.gt.s32.totalorder 0, %v613
    %v615 = vsel %vm614, 0, %v613
    %v616 = vsub.s32 32, %v615
    %v617 = vshll.u32 %v608, %v615
    %v618 = vshrl.u32 %v600, %v616
    %v619 = vor.u32 %v617, %v618
    %v620 = vsub.s32 4294967266, %v615
    %v621 = vadd.s32 %v620, 127
    %v622 = vshll.u32 %v621, 23
    %v623 = vor.u32 4788187, %v622
    %v624 = vand.u32 2147483647, %v623
    %v626 = vcvt.s32.f32 %v619
    %v627 = vmul.f32 %v626, %v624
    %v628 = vxor.u32 %v627, 2147483648
    %v629 = vsel %vm546, %v628, %v627
    %v630 = vsub.s32 4, %v606
    %v631 = vsel %vm546, %v630, %v606
    %v632 = vsel %vm545, %v533, %v629
    %v633 = vsel %vm545, 0, %v631
    %v634 = vcosq.f32.pop %v632
    %v635 = vsinq.f32.pop %v632
    %vm636 = vweird.f32 %v533
    %v637 = vadd.s32 %v633, 3
    %v638 = vand.u32 %v637, 3
    %vm639 = vcmp.lt.s32.totalorder %v638, 2
    %vm640 = vcmp.eq.s32.totalorder %v638, 0
    %v641 = vxor.u32 %v635, 2147483648
    %v642 = vsel %vm640, %v634, %v641
    %vm643 = vcmp.eq.s32.totalorder %v638, 2
    %v644 = vxor.u32 %v634, 2147483648
    %v645 = vsel %vm643, %v644, %v635
    %v646 = vsel %vm639, %v642, %v645
    %v647 = vsel %vm636, nan, %v646
    %v648 = vand.u32 2147483647, %v535
    %vm649 = vcmp.le.f32.partialorder %v648, 0.7853982
    %vm650 = vcmp.lt.s32.totalorder %v535, 0
    %v651 = vand.u32 %v535, 2139095040
    %v652 = vshrl.u32 %v651, 23
    %v653 = vsub.s32 %v652, 127
    %v654 = vand.u32 2147483647, %v535
    %v655 = vand.u32 %v654, 8388607
    %v656 = vor.u32 %v655, 8388608
    %v657 = vsub.s32 0, %v656
    %v658 = vadd.s32 %v653, 1
    %vm659 = vcmp.gt.s32.totalorder %v658, 0
    %v660 = vsel %vm659, %v658, 0
    %v661 = vshrl.u32 %v660, 5
    %v662 = vand.u32 %v660, 31
    %v663 = vsub.s32 32, %v662
    %v664 = vshrl.u32 683565275, %v663
    %v665 = vshll.u32 683565275, %v662
    %v666 = vshrl.u32 2475754826, %v663
    %v667 = vor.u32 %v665, %v666
    %v668 = vshll.u32 2475754826, %v662
    %v669 = vshrl.u32 2131351028, %v663
    %v670 = vor.u32 %v668, %v669
    %v671 = vshll.u32 2131351028, %v662
    %v672 = vshrl.u32 2102212464, %v663
    %v673 = vor.u32 %v671, %v672
    %v674 = vshll.u32 2102212464, %v662
    %v675 = vshrl.u32 920167782, %v663
    %v676 = vor.u32 %v674, %v675
    %v677 = vshll.u32 920167782, %v662
    %v678 = vshrl.u32 1326507024, %v663
    %v679 = vor.u32 %v677, %v678
    %vm680 = vcmp.lt.s32.totalorder %v661, 1
    %vm681 = vcmp.lt.s32.totalorder %v661, 2
    %vm682 = vcmp.lt.s32.totalorder %v661, 3
    %vm683 = vcmp.lt.s32.totalorder %v661, 4
    %v684 = vsel %vm680, %v664, %v667
    %v685 = vsel %vm683, %v673, 2102212464
    %v686 = vsel %vm682, %v670, %v685
    %v687 = vsel %vm681, %v684, %v686
    %v688 = vsel %vm680, %v667, %v670
    %v689 = vsel %vm683, %v676, 920167782
    %v690 = vsel %vm682, %v673, %v689
    %v691 = vsel %vm681, %v688, %v690
    %v692 = vsel %vm680, %v670, %v673
    %v693 = vsel %vm683, %v679, 1326507024
    %v694 = vsel %vm682, %v676, %v693
    %v695 = vsel %vm681, %v692, %v694
    %v696 = vshll.u32 %v656, 8
    %v697 = vmul.u32.u64.compose %v696, %v695
    %v698 = vextract.low.u32 %v697
    %v699 = vextract.high.u32 %v697
    %v700 = vmul.u32.u64.compose %v696, %v691
    %v701 = vextract.low.u32 %v700
    %v702 = vextract.high.u32 %v700
    %v703 = vmul.u32 %v696, %v687
    %v704 = vadd.s32 %v699, %v701
    %vm705 = vc.u32 %v699, %v701
    %v706 = vadd.s32 %v702, 1
    %v707 = vsel %vm705, %v706, %v702
    %v708 = vadd.s32 %v703, %v707
    %v709 = vadd.s32 %v708, 536870912
    %v710 = vshrl.u32 %v709, 30
    %v711 = vshll.u32 %v710, 30
    %v712 = vsub.s32 %v708, %v711
    %vm713 = vcmp.lt.s32.totalorder %v712, 0
    %v714 = vsub.s32 0, %v712
    %v715 = vsel %vm713, %v714, %v712
    %v716 = vclz %v715
    %v717 = vsub.s32 %v716, 2
    %vm718 = vcmp.gt.s32.totalorder 0, %v717
    %v719 = vsel %vm718, 0, %v717
    %v720 = vsub.s32 32, %v719
    %v721 = vshll.u32 %v712, %v719
    %v722 = vshrl.u32 %v704, %v720
    %v723 = vor.u32 %v721, %v722
    %v724 = vsub.s32 4294967266, %v719
    %v725 = vadd.s32 %v724, 127
    %v726 = vshll.u32 %v725, 23
    %v727 = vor.u32 4788187, %v726
    %v728 = vand.u32 2147483647, %v727
    %v730 = vcvt.s32.f32 %v723
    %v731 = vmul.f32 %v730, %v728
    %v732 = vxor.u32 %v731, 2147483648
    %v733 = vsel %vm650, %v732, %v731
    %v734 = vsub.s32 4, %v710
    %v735 = vsel %vm650, %v734, %v710
    %v736 = vsel %vm649, %v535, %v733
    %v737 = vsel %vm649, 0, %v735
    %v738 = vcosq.f32.pop %v736
    %v739 = vsinq.f32.pop %v736
    %vm740 = vweird.f32 %v535
    %v741 = vadd.s32 %v737, 3
    %v742 = vand.u32 %v741, 3
    %vm743 = vcmp.lt.s32.totalorder %v742, 2
    %vm744 = vcmp.eq.s32.totalorder %v742, 0
    %v745 = vxor.u32 %v739, 2147483648
    %v746 = vsel %vm744, %v738, %v745
    %vm747 = vcmp.eq.s32.totalorder %v742, 2
    %v748 = vxor.u32 %v738, 2147483648
    %v749 = vsel %vm747, %v748, %v739
    %v750 = vsel %vm743, %v746, %v749
    %v751 = vsel %vm740, nan, %v750
    %v752 = vand.u32 2147483647, %v540
    %vm753 = vcmp.le.f32.partialorder %v752, 0.7853982
    %vm754 = vcmp.lt.s32.totalorder %v540, 0
    %v755 = vand.u32 %v540, 2139095040
    %v756 = vshrl.u32 %v755, 23
    %v757 = vsub.s32 %v756, 127
    %v758 = vand.u32 2147483647, %v540
    %v759 = vand.u32 %v758, 8388607
    %v760 = vor.u32 %v759, 8388608
    %v761 = vsub.s32 0, %v760
    %v762 = vadd.s32 %v757, 1
    %vm763 = vcmp.gt.s32.totalorder %v762, 0
    %v764 = vsel %vm763, %v762, 0
    %v765 = vshrl.u32 %v764, 5
    %v766 = vand.u32 %v764, 31
    %v767 = vsub.s32 32, %v766
    %v768 = vshrl.u32 683565275, %v767
    %v769 = vshll.u32 683565275, %v766
    %v770 = vshrl.u32 2475754826, %v767
    %v771 = vor.u32 %v769, %v770
    %v772 = vshll.u32 2475754826, %v766
    %v773 = vshrl.u32 2131351028, %v767
    %v774 = vor.u32 %v772, %v773
    %v775 = vshll.u32 2131351028, %v766
    %v776 = vshrl.u32 2102212464, %v767
    %v777 = vor.u32 %v775, %v776
    %v778 = vshll.u32 2102212464, %v766
    %v779 = vshrl.u32 920167782, %v767
    %v780 = vor.u32 %v778, %v779
    %v781 = vshll.u32 920167782, %v766
    %v782 = vshrl.u32 1326507024, %v767
    %v783 = vor.u32 %v781, %v782
    %vm784 = vcmp.lt.s32.totalorder %v765, 1
    %vm785 = vcmp.lt.s32.totalorder %v765, 2
    %vm786 = vcmp.lt.s32.totalorder %v765, 3
    %vm787 = vcmp.lt.s32.totalorder %v765, 4
    %v788 = vsel %vm784, %v768, %v771
    %v789 = vsel %vm787, %v777, 2102212464
    %v790 = vsel %vm786, %v774, %v789
    %v791 = vsel %vm785, %v788, %v790
    %v792 = vsel %vm784, %v771, %v774
    %v793 = vsel %vm787, %v780, 920167782
    %v794 = vsel %vm786, %v777, %v793
    %v795 = vsel %vm785, %v792, %v794
    %v796 = vsel %vm784, %v774, %v777
    %v797 = vsel %vm787, %v783, 1326507024
    %v798 = vsel %vm786, %v780, %v797
    %v799 = vsel %vm785, %v796, %v798
    %v800 = vshll.u32 %v760, 8
    %v801 = vmul.u32.u64.compose %v800, %v799
    %v802 = vextract.low.u32 %v801
    %v803 = vextract.high.u32 %v801
    %v804 = vmul.u32.u64.compose %v800, %v795
    %v805 = vextract.low.u32 %v804
    %v806 = vextract.high.u32 %v804
    %v807 = vmul.u32 %v800, %v791
    %v808 = vadd.s32 %v803, %v805
    %vm809 = vc.u32 %v803, %v805
    %v810 = vadd.s32 %v806, 1
    %v811 = vsel %vm809, %v810, %v806
    %v812 = vadd.s32 %v807, %v811
    %v813 = vadd.s32 %v812, 536870912
    %v814 = vshrl.u32 %v813, 30
    %v815 = vshll.u32 %v814, 30
    %v816 = vsub.s32 %v812, %v815
    %vm817 = vcmp.lt.s32.totalorder %v816, 0
    %v818 = vsub.s32 0, %v816
    %v819 = vsel %vm817, %v818, %v816
    %v820 = vclz %v819
    %v821 = vsub.s32 %v820, 2
    %vm822 = vcmp.gt.s32.totalorder 0, %v821
    %v823 = vsel %vm822, 0, %v821
    %v824 = vsub.s32 32, %v823
    %v825 = vshll.u32 %v816, %v823
    %v826 = vshrl.u32 %v808, %v824
    %v827 = vor.u32 %v825, %v826
    %v828 = vsub.s32 4294967266, %v823
    %v829 = vadd.s32 %v828, 127
    %v830 = vshll.u32 %v829, 23
    %v831 = vor.u32 4788187, %v830
    %v832 = vand.u32 2147483647, %v831
    %v834 = vcvt.s32.f32 %v827
    %v835 = vmul.f32 %v834, %v832
    %v836 = vxor.u32 %v835, 2147483648
    %v837 = vsel %vm754, %v836, %v835
    %v838 = vsub.s32 4, %v814
    %v839 = vsel %vm754, %v838, %v814
    %v840 = vsel %vm753, %v540, %v837
    %v841 = vsel %vm753, 0, %v839
    %v842 = vcosq.f32.pop %v840
    %v843 = vsinq.f32.pop %v840
    %vm844 = vweird.f32 %v540
    %v845 = vadd.s32 %v841, 3
    %v846 = vand.u32 %v845, 3
    %vm847 = vcmp.lt.s32.totalorder %v846, 2
    %vm848 = vcmp.eq.s32.totalorder %v846, 0
    %v849 = vxor.u32 %v843, 2147483648
    %v850 = vsel %vm848, %v842, %v849
    %vm851 = vcmp.eq.s32.totalorder %v846, 2
    %v852 = vxor.u32 %v842, 2147483648
    %v853 = vsel %vm851, %v852, %v843
    %v854 = vsel %vm847, %v850, %v853
    %v855 = vsel %vm844, nan, %v854
    %v856 = vand.u32 2147483647, %v542
    %vm857 = vcmp.le.f32.partialorder %v856, 0.7853982
    %vm858 = vcmp.lt.s32.totalorder %v542, 0
    %v859 = vand.u32 %v542, 2139095040
    %v860 = vshrl.u32 %v859, 23
    %v861 = vsub.s32 %v860, 127
    %v862 = vand.u32 2147483647, %v542
    %v863 = vand.u32 %v862, 8388607
    %v864 = vor.u32 %v863, 8388608
    %v865 = vsub.s32 0, %v864
    %v866 = vadd.s32 %v861, 1
    %vm867 = vcmp.gt.s32.totalorder %v866, 0
    %v868 = vsel %vm867, %v866, 0
    %v869 = vshrl.u32 %v868, 5
    %v870 = vand.u32 %v868, 31
    %v871 = vsub.s32 32, %v870
    %v872 = vshrl.u32 683565275, %v871
    %v873 = vshll.u32 683565275, %v870
    %v874 = vshrl.u32 2475754826, %v871
    %v875 = vor.u32 %v873, %v874
    %v876 = vshll.u32 2475754826, %v870
    %v877 = vshrl.u32 2131351028, %v871
    %v878 = vor.u32 %v876, %v877
    %v879 = vshll.u32 2131351028, %v870
    %v880 = vshrl.u32 2102212464, %v871
    %v881 = vor.u32 %v879, %v880
    %v882 = vshll.u32 2102212464, %v870
    %v883 = vshrl.u32 920167782, %v871
    %v884 = vor.u32 %v882, %v883
    %v885 = vshll.u32 920167782, %v870
    %v886 = vshrl.u32 1326507024, %v871
    %v887 = vor.u32 %v885, %v886
    %vm888 = vcmp.lt.s32.totalorder %v869, 1
    %vm889 = vcmp.lt.s32.totalorder %v869, 2
    %vm890 = vcmp.lt.s32.totalorder %v869, 3
    %vm891 = vcmp.lt.s32.totalorder %v869, 4
    %v892 = vsel %vm888, %v872, %v875
    %v893 = vsel %vm891, %v881, 2102212464
    %v894 = vsel %vm890, %v878, %v893
    %v895 = vsel %vm889, %v892, %v894
    %v896 = vsel %vm888, %v875, %v878
    %v897 = vsel %vm891, %v884, 920167782
    %v898 = vsel %vm890, %v881, %v897
    %v899 = vsel %vm889, %v896, %v898
    %v900 = vsel %vm888, %v878, %v881
    %v901 = vsel %vm891, %v887, 1326507024
    %v902 = vsel %vm890, %v884, %v901
    %v903 = vsel %vm889, %v900, %v902
    %v904 = vshll.u32 %v864, 8
    %v905 = vmul.u32.u64.compose %v904, %v903
    %v906 = vextract.low.u32 %v905
    %v907 = vextract.high.u32 %v905
    %v908 = vmul.u32.u64.compose %v904, %v899
    %v909 = vextract.low.u32 %v908
    %v910 = vextract.high.u32 %v908
    %v911 = vmul.u32 %v904, %v895
    %v912 = vadd.s32 %v907, %v909
    %vm913 = vc.u32 %v907, %v909
    %v914 = vadd.s32 %v910, 1
    %v915 = vsel %vm913, %v914, %v910
    %v916 = vadd.s32 %v911, %v915
    %v917 = vadd.s32 %v916, 536870912
    %v918 = vshrl.u32 %v917, 30
    %v919 = vshll.u32 %v918, 30
    %v920 = vsub.s32 %v916, %v919
    %vm921 = vcmp.lt.s32.totalorder %v920, 0
    %v922 = vsub.s32 0, %v920
    %v923 = vsel %vm921, %v922, %v920
    %v924 = vclz %v923
    %v925 = vsub.s32 %v924, 2
    %vm926 = vcmp.gt.s32.totalorder 0, %v925
    %v927 = vsel %vm926, 0, %v925
    %v928 = vsub.s32 32, %v927
    %v929 = vshll.u32 %v920, %v927
    %v930 = vshrl.u32 %v912, %v928
    %v931 = vor.u32 %v929, %v930
    %v932 = vsub.s32 4294967266, %v927
    %v933 = vadd.s32 %v932, 127
    %v934 = vshll.u32 %v933, 23
    %v935 = vor.u32 4788187, %v934
    %v936 = vand.u32 2147483647, %v935
    %v938 = vcvt.s32.f32 %v931
    %v939 = vmul.f32 %v938, %v936
    %v940 = vxor.u32 %v939, 2147483648
    %v941 = vsel %vm858, %v940, %v939
    %v942 = vsub.s32 4, %v918
    %v943 = vsel %vm858, %v942, %v918
    %v944 = vsel %vm857, %v542, %v941
    %v945 = vsel %vm857, 0, %v943
    %v946 = vcosq.f32.pop %v944
    %v947 = vsinq.f32.pop %v944
    %vm948 = vweird.f32 %v542
    %v949 = vadd.s32 %v945, 3
    %v950 = vand.u32 %v949, 3
    %vm951 = vcmp.lt.s32.totalorder %v950, 2
    %vm952 = vcmp.eq.s32.totalorder %v950, 0
    %v953 = vxor.u32 %v947, 2147483648
    %v954 = vsel %vm952, %v946, %v953
    %vm955 = vcmp.eq.s32.totalorder %v950, 2
    %v956 = vxor.u32 %v946, 2147483648
    %v957 = vsel %vm955, %v956, %v947
    %v958 = vsel %vm951, %v954, %v957
    %v959 = vsel %vm948, nan, %v958
    %960 = vst [vmem:[#allocation2] sm:$0xff] %v647
    %961 = vst [vmem:[#allocation2 + $0x8] sm:$0xff] %v751
    %962 = vst [vmem:[#allocation2 + $0x10] sm:$0x1f] %v855
    %963 = vst [vmem:[#allocation2 + $0x18] sm:$0x1f] %v959
    // Predicated region
    $region10: #{tpu_custom_call.1} parent=1 // pred_check
      _
    $region11: #{tpu_custom_call.1} parent=1 // pred_check_branch
      %965 = sbr.rel (0) target = $region13
    $region12: #{tpu_custom_call.1} parent=1 // pred_region
      %s967 = ssub.s32 512, 512
      %968 = vsyncadd [#allocation3], %s967
      %s969 = sshll.u32 [#allocation2], 4
      %s970 = int_to_ptr.vmem [resolvable:$true] %s969
      %975 = dma.vmem_to_hbm [thread:$0]  %s970, 512, %s2, [#allocation3], 256, 256, 16
    $region13: #{tpu_custom_call.1} parent=1 // pred_fallthru
      _
    // Predicated region
    $region14: #{tpu_custom_call.1} parent=1 // pred_check
      _
    $region15: #{tpu_custom_call.1} parent=1 // pred_check_branch
      %977 = sbr.rel (0) target = $region17
    $region16: #{tpu_custom_call.1} parent=1 // pred_region
      %978 = dma.done [#allocation3], 512
    $region17: #{tpu_custom_call.1} parent=1 // pred_fallthru
      _
    %979 = vsyncpa [#allocation3], 1

</llo_original>
